<compile_context>
chip_gen: v5e
topology: v5e:2x2
jax: 0.10.0
libtpu: 0.0.40
codegen_flags: <defaults>
</compile_context>

<pallas_src>
from functools import partial

import jax
import jax.numpy as jnp
from jax.experimental import pallas as pl
from jax.experimental.pallas import tpu as pltpu


def _gem_kernel(s_ref, x_ref, pmat_ref, o_ref, *, eps, p_static, lane_bound,
                mask_lanes, bf16_pow):
    # s_ref   : SMEM (3,) f32 = [p, 1/p, (1/p)*log(1/K)]
    # x_ref   : VMEM (tR, K*tL)  -- natural layout, lane-dense
    # pmat_ref: VMEM (K*tL, tL)  -- 0/1 block-diagonal pooling matrix (resident)
    # o_ref   : VMEM (tR, tL)
    inv_p = s_ref[1]
    c = s_ref[2]  # (1/p) * log(1/K): folds the average into the final exponent

    x = x_ref[...]
    use_bf16 = bf16_pow and (x.dtype == jnp.bfloat16) and (p_static is None)
    comp_dtype = jnp.bfloat16 if use_bf16 else jnp.float32

    eps_c = jnp.asarray(eps, comp_dtype)
    xc = jnp.maximum(x.astype(comp_dtype), eps_c)

    if mask_lanes:
        # Edge tile along L: out-of-bounds lanes would otherwise feed garbage
        # (possibly inf/NaN after the pow) into the cross-lane pooling matmul.
        col = pl.program_id(1) * x_ref.shape[1] + jax.lax.broadcasted_iota(
            jnp.int32, xc.shape, 1)
        xc = jnp.where(col < lane_bound, xc, eps_c)

    if p_static is not None:
        # Frozen integer p: exponentiation by squaring on the VPU, zero
        # transcendentals per input element.
        n = p_static
        xp = None
        base = xc
        while n > 0:
            if n & 1:
                xp = base if xp is None else xp * base
            n >>= 1
            if n:
                base = base * base
    else:
        p = s_ref[0].astype(comp_dtype)
        xp = jnp.exp(p * jnp.log(xc))  # x ** p (non-integer exponent), EUP

    # Window-of-K pooling on the (otherwise idle) MXU; accumulate in f32.
    pooled = jnp.dot(xp, pmat_ref[...].astype(xp.dtype),
                     preferred_element_type=jnp.float32)

    # y = (pooled / K) ** (1/p) = exp(inv_p * log(pooled) + inv_p * log(1/K)).
    # pooled == 0 (underflow) gives log(0) = -inf -> exp = 0, matching x**p.
    y = jnp.exp(inv_p * jnp.log(pooled) + c)
    o_ref[...] = y.astype(o_ref.dtype)


def _vmem_capacity_bytes():
    try:
        info = pltpu.get_tpu_info()
        for attr in ("vmem_capacity_bytes", "vmem_size_bytes", "vmem_bytes"):
            v = getattr(info, attr, None)
            if v:
                return int(v)
    except Exception:
        pass
    return 64 * 1024 * 1024  # conservative default (v7x per-TC VMEM)


def _pick_tiles(R, Lout, K, itemsize, budget_bytes):
    """Lane-dense output tiles; contiguous (tR, K*tL) input blocks within budget."""
    # Lane tile (pooled-output width).  Cap at 256 so the (K*tL, tL) pooling
    # matrix stays small (<= 2 MiB for K=8) and matches the 256-wide MXU on
    # v6e/v7x (two passes on v5e's 128-wide MXU).
    t_l = Lout if Lout <= 256 else 256

    # Sublane packing: 8 rows for f32, 16 for bf16, 32 for int8/fp8.
    sub = max(8, 32 // max(1, itemsize))

    # Row tile: keep the (tR, K*tL) input block within the per-step budget.
    per_row = K * t_l * itemsize
    cap = max(sub, budget_bytes // per_row)
    cap = min(cap, 4096)  # bound f32 intermediates for skinny inputs
    if R <= cap:
        t_r = R
    else:
        t_r = max(sub, (cap // sub) * sub)

    # v7x megacore: make sure the "parallel" grid has >= 2 blocks when possible.
    if pl.cdiv(R, t_r) == 1 and pl.cdiv(Lout, t_l) == 1 and R >= 2 * sub:
        half = (R + 1) // 2
        t_r = ((half + sub - 1) // sub) * sub
    return t_r, t_l


def gem_pallas(x, p, *, kernel_size=8, eps=1e-6, bf16_pow=False):
    """x: (N, C, L); p: scalar parameter; returns (N, C, L // kernel_size)."""
    N, C, L = x.shape
    K = int(kernel_size)
    Lout = L // K
    if Lout == 0:
        return jnp.zeros((N, C, 0), x.dtype)
    R = N * C
    L_used = K * Lout

    # Natural layout: no transpose, no extra HBM pass.  The slice is a no-op
    # whenever L % K == 0 (the common case).
    xr = x.reshape(R, L)[:, :L_used]

    # Static integer-p fast path (the common frozen p=3 case).  If p is traced
    # (trainable under jit), float() raises and we fall back to the EUP path.
    p_static = None
    try:
        pv = float(p)
        if abs(pv - round(pv)) < 1e-12 and 1 <= int(round(pv)) <= 16:
            p_static = int(round(pv))
    except Exception:
        p_static = None

    p32 = jnp.asarray(p, jnp.float32).reshape(())
    inv_p = 1.0 / p32
    scal = jnp.stack([p32, inv_p, inv_p * jnp.log(jnp.float32(1.0 / K))])

    vmem_cap = _vmem_capacity_bytes()
    big_vmem = vmem_cap >= 100 * 1024 * 1024        # v5e / v6e (128 MiB VMEM)
    budget = (8 if big_vmem else 4) * 1024 * 1024   # per-step input block
    vmem_limit = (64 if big_vmem else 32) * 1024 * 1024

    t_r, t_l = _pick_tiles(R, Lout, K, x.dtype.itemsize, budget)
    mask_lanes = (Lout % t_l) != 0
    grid = (pl.cdiv(R, t_r), pl.cdiv(Lout, t_l))

    # 0/1 block-diagonal pooling matrix: P[i, j] = 1 iff i // K == j.
    # Constant index_map => DMA'd once and reused across all grid steps.
    pmat = (jnp.arange(K * t_l, dtype=jnp.int32)[:, None] // K
            == jnp.arange(t_l, dtype=jnp.int32)[None, :]).astype(jnp.float32)

    n_in = R * L_used
    n_out = R * Lout
    transc = 2 * n_out + (0 if p_static is not None else 2 * n_in)
    cost = pl.CostEstimate(
        flops=2 * K * n_out + 6 * n_in,
        transcendentals=transc,
        bytes_accessed=n_in * x.dtype.itemsize + n_out * x.dtype.itemsize,
    )

    out = pl.pallas_call(
        partial(_gem_kernel, eps=float(eps), p_static=p_static,
                lane_bound=L_used, mask_lanes=mask_lanes, bf16_pow=bf16_pow),
        out_shape=jax.ShapeDtypeStruct((R, Lout), x.dtype),
        grid=grid,
        in_specs=[
            pl.BlockSpec(memory_space=pltpu.MemorySpace.SMEM),   # [p, 1/p, c]
            pl.BlockSpec((t_r, K * t_l), lambda i, j: (i, j)),   # x slab
            pl.BlockSpec((K * t_l, t_l), lambda i, j: (0, 0)),   # pooling matrix
        ],
        out_specs=pl.BlockSpec((t_r, t_l), lambda i, j: (i, j)),
        compiler_params=pltpu.CompilerParams(
            dimension_semantics=("parallel", "parallel"),
            vmem_limit_bytes=vmem_limit,
        ),
        cost_estimate=cost,
    )(scal, xr, pmat)

    return out.reshape(N, C, Lout)


def gem_reference(x, p, *, kernel_size=8, eps=1e-6):
    N, C, L = x.shape
    Lout = L // kernel_size
    xc = jnp.maximum(x[:, :, : Lout * kernel_size], eps)
    xp = xc ** p
    pooled = xp.reshape(N, C, Lout, kernel_size).mean(axis=-1)
    return pooled ** (1.0 / p)


if __name__ == "__main__":
    key = jax.random.PRNGKey(0)
    N, C, L = 2, 4, 64
    kernel_size = 8

    x = jax.random.normal(key, (N, C, L), dtype=jnp.float32)
    # Deterministic parameter init, matching nn.Parameter(torch.ones(1) * 3).
    p = jnp.float32(3.0)

    y = gem_pallas(x, p, kernel_size=kernel_size, eps=1e-6)
    y = jax.block_until_ready(y)

    y_ref = gem_reference(x, p, kernel_size=kernel_size, eps=1e-6)
    assert y.shape == (N, C, L // kernel_size)
    assert jnp.allclose(y, y_ref, rtol=1e-4, atol=1e-5), (
        f"max abs err {jnp.max(jnp.abs(y - y_ref))}"
    )

    print("KERNEL_OK")
</pallas_src>

<mosaic_0001>
module attributes {stable_mosaic.version = 11 : i64} {
  func.func @_gem_kernel(%arg0: i32, %arg1: i32, %arg2: memref<3xf32, #tpu.memory_space<smem>>, %arg3: memref<8x64xf32, #tpu.memory_space<vmem>>, %arg4: memref<64x8xf32, #tpu.memory_space<vmem>>, %arg5: memref<8x8xf32, #tpu.memory_space<vmem>>) attributes {dimension_semantics = [#tpu.dimension_semantics<parallel>, #tpu.dimension_semantics<parallel>], iteration_bounds = array<i64: 1, 1>, scalar_prefetch = 0 : i64, scratch_operands = 0 : i64, tpu.core_type = #tpu.core_type<tc>, window_params = [{transform_indices = @transform_0, window_bounds = array<i64: 3>}, {transform_indices = @transform_1, window_bounds = array<i64: 8, 64>}, {pipeline_mode = #tpu.pipeline_mode<synchronous>, transform_indices = @transform_2, window_bounds = array<i64: 64, 8>}, {transform_indices = @transform_3, window_bounds = array<i64: 8, 8>}]} {
    %c1 = arith.constant 1 : index
    %0 = memref.load %arg2[%c1] : memref<3xf32, #tpu.memory_space<smem>>
    %c2 = arith.constant 2 : index
    %1 = memref.load %arg2[%c2] : memref<3xf32, #tpu.memory_space<smem>>
    %c0 = arith.constant 0 : index
    %c0_0 = arith.constant 0 : index
    %2 = vector.load %arg3[%c0, %c0_0] : memref<8x64xf32, #tpu.memory_space<vmem>>, vector<8x64xf32>
    %cst = arith.constant 9.99999997E-7 : f32
    %3 = vector.broadcast %cst : f32 to vector<8x64xf32>
    %4 = arith.maximumf %2, %3 : vector<8x64xf32>
    %5 = arith.mulf %4, %4 : vector<8x64xf32>
    %6 = arith.mulf %4, %5 : vector<8x64xf32>
    %c0_1 = arith.constant 0 : index
    %c0_2 = arith.constant 0 : index
    %7 = vector.load %arg4[%c0_1, %c0_2] : memref<64x8xf32, #tpu.memory_space<vmem>>, vector<64x8xf32>
    %cst_3 = arith.constant dense<0.000000e+00> : vector<8x8xf32>
    %8 = tpu.matmul %6, %7, %cst_3 {dimension_numbers = #tpu.dot_dimension_numbers<[1], [0], [0], [1], [0, 0, 1, 1], [], []>} : vector<8x64xf32>, vector<64x8xf32>, vector<8x8xf32> -> vector<8x8xf32>
    %9 = math.log %8 : vector<8x8xf32>
    %10 = vector.broadcast %0 : f32 to vector<8x8xf32>
    %11 = arith.mulf %10, %9 : vector<8x8xf32>
    %12 = vector.broadcast %1 : f32 to vector<8x8xf32>
    %13 = arith.addf %11, %12 : vector<8x8xf32>
    %14 = math.exp %13 : vector<8x8xf32>
    %c0_4 = arith.constant 0 : index
    %c0_5 = arith.constant 0 : index
    %15 = vector.load %arg5[%c0_4, %c0_5] : memref<8x8xf32, #tpu.memory_space<vmem>>, vector<8x8xf32>
    tpu.vector_store %arg5[%c0_4, %c0_5], %14 {strides = array<i32>} : memref<8x8xf32, #tpu.memory_space<vmem>>, vector<8x8xf32>,
    return
  }
  func.func @transform_0(%arg0: i32, %arg1: i32) -> i32 {
    %c0_i32 = arith.constant 0 : i32
    %c0_i32_0 = arith.constant 0 : i32
    return %c0_i32 : i32
  }
  func.func @transform_1(%arg0: i32, %arg1: i32) -> (i32, i32) {
    %c0_i32 = arith.constant 0 : i32
    return %arg0, %arg1 : i32, i32
  }
  func.func @transform_2(%arg0: i32, %arg1: i32) -> (i32, i32) {
    %c0_i32 = arith.constant 0 : i32
    %c0_i32_0 = arith.constant 0 : i32
    %c0_i32_1 = arith.constant 0 : i32
    return %c0_i32, %c0_i32_0 : i32, i32
  }
  func.func @transform_3(%arg0: i32, %arg1: i32) -> (i32, i32) {
    %c0_i32 = arith.constant 0 : i32
    return %arg0, %arg1 : i32, i32
  }
}

</mosaic_0001>

<llo_original>
// kernel: tpu_custom_call.1
$region0: #{tpu_custom_call.1}
  #allocation0 [shape = 'u32[]', space=smem, size = 0x4, offset = 0x4, fixed_abs, tag = 'smem constant byte address 0x4 - core index']
  #allocation1 [shape = 'u32[72,128]{1,0:T(1,128)}', space=vmem, size = 0x9000, scoped, tag = 'internal scratch']
  %s0 = inlined_call_operand.vmem [shape: f32[3], index: 0, kind: input, shape index: {}]
  %s1 = inlined_call_operand.vmem [shape: f32[8,64], index: 1, kind: input, shape index: {}]
  %s2 = inlined_call_operand.vmem [shape: f32[64,8], index: 2, kind: input, shape index: {}]
  %s3 = inlined_call_operand.hbm [shape: f32[8,8], index: 3, kind: output, shape index: {}]
  %s4 = sld [smem:[#allocation0]]
  $region26: #{tpu_custom_call.1} parent=0
    _
  %s6 = ssub.s32 1, %s4
  %s7 = scalar_select 0, %s6, %s4
  $region1: #{tpu_custom_call.1} parent=0
    #allocation2 [shape = 'u8[512]{0}', space=smem, size = 0x200, scoped, tag = 'input window, operand 0, single buffered']
    #allocation3 [shape = 's32[1]{0}', space=sflag, size = 0x4, scoped, tag = 'scoped memory for tpu_custom_call.1']
    #allocation4 [shape = 's32[1]{0}', space=sflag, size = 0x4, scoped, tag = 'scoped memory for tpu_custom_call.1']
    #allocation5 [shape = 'u8[4096]{0}', space=vmem, size = 0x1000, scoped, tag = 'output window, operand 0, single buffered']
    %8 = vsyncpa [#allocation4], 0
    %9 = vsyncpa [#allocation3], 0
    // Predicated region
    $region2: #{tpu_custom_call.1} parent=1 // pred_check
      _
    $region3: #{tpu_custom_call.1} parent=1 // pred_check_branch
      %11 = sbr.rel (0) target = $region5
    $region4: #{tpu_custom_call.1} parent=1 // pred_region
      %13 = vsyncadd [#allocation4], 0
      %s15 = sshll.u32 %s0, 4
      %s16 = int_to_ptr.vmem [resolvable:$true] %s15
      %18 = dma.vmem_to_smem %s16, 16, [#allocation2], [#allocation4]
    $region5: #{tpu_custom_call.1} parent=1 // pred_fallthru
      _
    // Predicated region
    $region6: #{tpu_custom_call.1} parent=1 // pred_check
      _
    $region7: #{tpu_custom_call.1} parent=1 // pred_check_branch
      %20 = sbr.rel (0) target = $region9
    $region8: #{tpu_custom_call.1} parent=1 // pred_region
      _
    $region9: #{tpu_custom_call.1} parent=1 // pred_fallthru
      _
    // Predicated region
    $region10: #{tpu_custom_call.1} parent=1 // pred_check
      _
    $region11: #{tpu_custom_call.1} parent=1 // pred_check_branch
      %22 = sbr.rel (0) target = $region13
    $region12: #{tpu_custom_call.1} parent=1 // pred_region
      _
    $region13: #{tpu_custom_call.1} parent=1 // pred_fallthru
      _
    // Predicated region
    $region14: #{tpu_custom_call.1} parent=1 // pred_check
      _
    $region15: #{tpu_custom_call.1} parent=1 // pred_check_branch
      %24 = sbr.rel (0) target = $region17
    $region16: #{tpu_custom_call.1} parent=1 // pred_region
      %26 = dma.done [#allocation4], 16
    $region17: #{tpu_custom_call.1} parent=1 // pred_fallthru
      _
    %27 = sfence
    %s28 = sld [smem:[#allocation2 + $0x1]]
    %s29 = sld [smem:[#allocation2 + $0x2]]
    %v30 = vld [vmem:[%s1] sm:$0xff]
    %v31 = vmax.f32 %v30, 1e-06
    %v32 = vmul.f32 %v31, %v31
    %v33 = vmul.f32 %v31, %v32
    %v34 = vld [vmem:[%s2] sm:$0xff]
    %v35 = vld [vmem:[%s2 + $0x8] sm:$0xff]
    %v36 = vld [vmem:[%s2 + $0x10] sm:$0xff]
    %v37 = vld [vmem:[%s2 + $0x18] sm:$0xff]
    %v38 = vld [vmem:[%s2 + $0x20] sm:$0xff]
    %v39 = vld [vmem:[%s2 + $0x28] sm:$0xff]
    %v40 = vld [vmem:[%s2 + $0x30] sm:$0xff]
    %v41 = vld [vmem:[%s2 + $0x38] sm:$0xff]
    %vm42 = vcmask 523264
    %v44 = vsel %vm42, %v33, 0
    %46 = vmatpush.msra.mxu0 0.0
    %47 = vmatpush.msra.mxu0 0.0
    %48 = vmatpush.msra.mxu0 0.0
    %49 = vmatpush.msra.mxu0 0.0
    %50 = vmatpush.msra.mxu0 0.0
    %51 = vmatpush.msra.mxu0 0.0
    %52 = vmatpush.msra.mxu0 0.0
    %53 = vmatpush.msra.mxu0 0.0
    %54 = vmatpush.msra.mxu0 %v41
    %55 = vmatpush.msra.mxu0 %v40
    %56 = vmatpush.msra.mxu0 %v39
    %57 = vmatpush.msra.mxu0 %v38
    %58 = vmatpush.msra.mxu0 %v37
    %59 = vmatpush.msra.mxu0 %v36
    %60 = vmatpush.msra.mxu0 %v35
    %61 = vmatpush.msra.mxu0 %v34
    %62 = vmatmul.f32.gmra.mxu0 %v44
    %v63 = vpop.f32.mrf.mxu0
    %v64 = vadd.f32 0.0, %v63
    %65 = vdwg.mxu0
    %v66 = vlog2.pop %v64
    %v67 = vmul.f32 %v66, 0.6931472
    %v68 = vstv %s28
    %v69 = vmul.f32 %v68, %v67
    %v70 = vstv %s29
    %v71 = vadd.f32 %v69, %v70
    %v72 = vmul.f32 %v71, 1.442695
    %v73 = vpow.pop %v72
    %vm74 = vcmask 64512
    %75 = vst.msk [vmem:[#allocation5] sm:$0xff] %vm74, %v73
    // Predicated region
    $region18: #{tpu_custom_call.1} parent=1 // pred_check
      _
    $region19: #{tpu_custom_call.1} parent=1 // pred_check_branch
      %77 = sbr.rel (0) target = $region21
    $region20: #{tpu_custom_call.1} parent=1 // pred_region
      %79 = vsyncadd [#allocation3], 0
      %s81 = sshll.u32 [#allocation5], 4
      %s82 = int_to_ptr.vmem [resolvable:$true] %s81
      %s83 = sshll.u32 %s3, 4
      %s84 = int_to_ptr.hbm [resolvable:$true] %s83
      %86 = dma.vmem_to_hbm [thread:$0]  %s82, 128, %s84, [#allocation3]
    $region21: #{tpu_custom_call.1} parent=1 // pred_fallthru
      _
    // Predicated region
    $region22: #{tpu_custom_call.1} parent=1 // pred_check
      _
    $region23: #{tpu_custom_call.1} parent=1 // pred_check_branch
      %88 = sbr.rel (0) target = $region25
    $region24: #{tpu_custom_call.1} parent=1 // pred_region
      %90 = dma.done [#allocation3], 128
    $region25: #{tpu_custom_call.1} parent=1 // pred_fallthru
      _
    %91 = vsyncpa [#allocation3], 1
    %92 = vsyncpa [#allocation4], 1

</llo_original>
